<compile_context>
chip_gen: v7x
topology: tpu7x:2x2x1
jax: 0.10.0
libtpu: 0.0.40
codegen_flags: <defaults>
</compile_context>

<pallas_src>
import functools

import jax
import jax.numpy as jnp
from jax import lax
from jax.experimental import pallas as pl
from jax.experimental.pallas import tpu as pltpu

LANE = 128            # lane width of a vreg
SUB_ROWS = 512        # rows per in-kernel compute sub-slice (64 vregs)
MAX_TILE_ROWS = 4096  # 4096*128*4B = 2 MiB per f32 input block per buffer


def _round_up(a, b):
    return -(-a // b) * b


@functools.lru_cache(maxsize=1)
def _num_parallel_chunks():
    """2 grid chunks only on multi-TensorCore chips; 1 on v5e/v6e (single TC)."""
    try:
        kind = jax.devices()[0].device_kind.lower()
    except Exception:
        return 1
    if any(s in kind for s in ("v5e", "v6e", "lite")):
        return 1
    return 2


def _make_kernel(gamma, alpha, w0, w1, rows, steps, tile_rows, sub_rows,
                 needs_mask):
    """Fused focal-BCE + smooth-L1, statically weighted, folded per chunk."""
    alpha = float(alpha)
    w0 = float(w0)
    w1 = float(w1)
    n_sub = tile_rows // sub_rows          # tile_rows is a multiple of sub_rows

    const_at = (alpha == 0.5)              # alpha == 1 - alpha -> at is constant
    # fold the BCE negate + class weight + w0 into one constant per class
    cf = -w0 * alpha                       # used when at is constant
    cf0 = -w0 * alpha                      # target == 0
    cf1 = -w0 * (1.0 - alpha)              # target == 1
    cq = 0.5 * w1                          # smooth-L1 quadratic branch scale
    cl = w1                                # smooth-L1 linear slope
    cc = 0.5 * w1                          # smooth-L1 linear offset

    def kernel(x_ref, t_ref, out_ref, acc_ref):
        s = pl.program_id(1)

        # zero the (8, LANE) per-chunk partial-sum at the first reduction step
        @pl.when(s == 0)
        def _():
            acc_ref[...] = jnp.zeros_like(acc_ref)

        if needs_mask:
            # UNCLAMPED logical row offset of this step (the DMA index_map is
            # clamped separately; this pairing makes duplicated/OOB rows
            # contribute exactly zero).
            row0 = (pl.program_id(0) * steps + s) * tile_rows

        def run(masked):
            def accumulate(j):
                if n_sub == 1:
                    x = x_ref[...].astype(jnp.float32)
                    t = t_ref[...].astype(jnp.float32)
                    off = 0
                else:
                    off = pl.multiple_of(j * sub_rows, sub_rows)
                    x = x_ref[pl.ds(off, sub_rows), :].astype(jnp.float32)
                    t = t_ref[pl.ds(off, sub_rows), :].astype(jnp.float32)

                # Binary targets in [0,1]:  d = |x-t| = 1 - p_t  (same
                # assumption PyTorch's alpha.gather on long targets makes).
                d = jnp.abs(x - t)
                if masked:
                    rel = lax.broadcasted_iota(jnp.int32, (sub_rows, LANE), 0)
                    remaining = (rows - row0) - off        # scalar
                    d = jnp.where(rel < remaining, d, 0.0)  # d=0 => 0 loss

                # --- FocalLoss ---  bce = -max(log(p), -100)  (PyTorch clamp)
                log_p = jnp.maximum(jnp.log(1.0 - d), -100.0)
                dd = d * d
                dg = dd if gamma == 2 else d ** gamma
                if const_at:
                    focal = (cf * dg) * log_p              # == w0*at*dg*bce
                else:
                    at = jnp.where(t == 0.0, jnp.float32(cf0), jnp.float32(cf1))
                    focal = (at * dg) * log_p

                # --- SmoothL1 (beta=1.0, PyTorch default), w1 pre-folded ---
                l1 = jnp.where(d < 1.0, cq * dd, cl * d - cc)

                contrib = focal + l1
                # fold the whole sub-slice into one (8, LANE) vreg row-group
                acc_ref[...] += contrib.reshape(sub_rows // 8, 8, LANE).sum(axis=0)

            if n_sub == 1:
                accumulate(0)
            else:
                def body(j, carry):
                    accumulate(j)
                    return carry
                lax.fori_loop(0, n_sub, body, 0)

        if not needs_mask:
            run(False)
        else:
            # gate the mask to the (rare) ragged / duplicated steps only
            ragged = row0 + tile_rows > rows

            @pl.when(jnp.logical_not(ragged))
            def _():
                run(False)

            @pl.when(ragged)
            def _():
                run(True)

        @pl.when(s == pl.num_programs(1) - 1)
        def _():
            out_ref[0] = acc_ref[...]

    return kernel


@functools.partial(jax.jit, static_argnames=("gamma", "alpha", "weights"))
def focal_l1_loss(inputs, targets, gamma=2, alpha=0.5, weights=(1.0, 0.5)):
    n_elem = inputs.size

    # Keep gamma a static Python int when integral so d**gamma lowers to
    # integer_pow (VPU) instead of pow (EUP exp+log).
    if float(gamma) == int(gamma):
        gamma = int(gamma)

    x = inputs.reshape(-1)   # free reshape; dtype cast happens in-kernel
    t = targets.reshape(-1)

    # Pad (which copies) only in the rare non-lane-aligned / tiny-tensor case.
    # Padded elements are (x=0, t=0) -> d=0 -> contribute exactly 0.
    pad_to = max(_round_up(n_elem, LANE), 8 * LANE)
    if pad_to != n_elem:
        x = jnp.pad(x, (0, pad_to - n_elem))
        t = jnp.pad(t, (0, pad_to - n_elem))

    rows = pad_to // LANE
    x2 = x.reshape(rows, LANE)
    t2 = t.reshape(rows, LANE)

    # Big blocks on large tensors (HBM-streaming bound); small tensors get a
    # single (or few) block(s).  tile_rows is always a multiple of sub_rows.
    if rows >= MAX_TILE_ROWS:
        tile_rows = MAX_TILE_ROWS
    else:
        tile_rows = min(SUB_ROWS, (rows // 8) * 8)
    sub_rows = min(SUB_ROWS, tile_rows)

    n_blocks = -(-rows // tile_rows)
    num_chunks = min(_num_parallel_chunks(), n_blocks)
    steps = -(-n_blocks // num_chunks)
    # mask only if there is a ragged edge or duplicated (clamped) steps
    needs_mask = (num_chunks * steps * tile_rows != rows)

    def idx_map(c, s):
        # clamp so the (rare) extra step of the last chunk re-reads a valid
        # block; its contribution is zeroed by the in-kernel mask.
        return (jnp.minimum(c * steps + s, n_blocks - 1), 0)

    partials = pl.pallas_call(
        _make_kernel(gamma, alpha, weights[0], weights[1],
                     rows, steps, tile_rows, sub_rows, needs_mask),
        out_shape=jax.ShapeDtypeStruct((num_chunks, 8, LANE), jnp.float32),
        grid_spec=pltpu.PrefetchScalarGridSpec(
            num_scalar_prefetch=0,
            grid=(num_chunks, steps),
            in_specs=[
                pl.BlockSpec((tile_rows, LANE), idx_map),
                pl.BlockSpec((tile_rows, LANE), idx_map),
            ],
            out_specs=pl.BlockSpec((1, 8, LANE), lambda c, s: (c, 0, 0)),
            scratch_shapes=[pltpu.VMEM((8, LANE), jnp.float32)],
        ),
        compiler_params=pltpu.CompilerParams(
            dimension_semantics=("parallel", "arbitrary"),
            vmem_limit_bytes=32 * 1024 * 1024,
        ),
    )(x2, t2)

    # weights are already folded into the fused accumulator:
    # loss = (w0*sum(focal) + w1*sum(l1)) / n = sum(w0*focal + w1*l1) / n
    return jnp.sum(partials) / jnp.float32(n_elem)


def _reference(inputs, targets, gamma=2, alpha=0.5, weights=(1.0, 0.5)):
    """Pure-JAX reference mirroring the PyTorch module (3-transcendental form)."""
    x = inputs.astype(jnp.float32)
    t = targets.astype(jnp.float32)
    log_x = jnp.maximum(jnp.log(x), -100.0)
    log_1mx = jnp.maximum(jnp.log(1.0 - x), -100.0)
    bce = -(t * log_x + (1.0 - t) * log_1mx)
    at = jnp.where(t == 0.0, alpha, 1.0 - alpha)
    pt = jnp.exp(-bce)
    focal = jnp.mean(at * (1.0 - pt) ** gamma * bce)
    d = jnp.abs(x - t)
    l1 = jnp.mean(jnp.where(d < 1.0, 0.5 * d * d, d - 0.5))
    return weights[0] * focal + weights[1] * l1


if __name__ == "__main__":
    key = jax.random.PRNGKey(0)

    # NCHW like the PyTorch usage: predicted probabilities + binary targets.
    #  (2,4,16,16)   : lane-aligned, single block (no mask path)
    #  (3,5,37,29)   : non-aligned / ragged edge  (masked edge block)
    #  (1,8,256,320) : multi-block + inner sub-slice loop + gated mask
    shapes = [(2, 4, 16, 16), (3, 5, 37, 29), (1, 8, 256, 320)]

    for shape in shapes:
        key, k_in, k_tgt = jax.random.split(key, 3)
        inputs = jax.random.uniform(k_in, shape, dtype=jnp.float32,
                                    minval=1e-3, maxval=1.0 - 1e-3)
        targets = jax.random.bernoulli(k_tgt, p=0.5, shape=shape).astype(jnp.float32)

        out = focal_l1_loss(inputs, targets)
        out = jax.block_until_ready(out)

        ref = _reference(inputs, targets)
        assert jnp.allclose(out, ref, rtol=1e-4, atol=1e-6), (shape, out, ref)

    print("KERNEL_OK")
</pallas_src>

<mosaic_0001>
module attributes {stable_mosaic.version = 11 : i64} {
  func.func @kernel(%arg0: i32, %arg1: i32, %arg2: memref<16x128xf32, #tpu.memory_space<vmem>>, %arg3: memref<16x128xf32, #tpu.memory_space<vmem>>, %arg4: memref<1x8x128xf32, #tpu.memory_space<vmem>>, %arg5: memref<8x128xf32, #tpu.memory_space<vmem>>) attributes {dimension_semantics = [#tpu.dimension_semantics<parallel>, #tpu.dimension_semantics<arbitrary>], iteration_bounds = array<i64: 1, 1>, scalar_prefetch = 0 : i64, scratch_operands = 1 : i64, tpu.core_type = #tpu.core_type<tc>, window_params = [{transform_indices = @transform_0, window_bounds = array<i64: 16, 128>}, {transform_indices = @transform_1, window_bounds = array<i64: 16, 128>}, {transform_indices = @transform_2, window_bounds = array<i64: 1, 8, 128>}]} {
    %c0_i32 = arith.constant 0 : i32
    %0 = arith.cmpi eq, %arg1, %c0_i32 : i32
    %1 = arith.extui %0 : i1 to i32
    %c0_i32_0 = arith.constant 0 : i32
    %2 = arith.cmpi ne, %1, %c0_i32_0 : i32
    scf.if %2 {
      %cst_17 = arith.constant 0.000000e+00 : f32
      %34 = vector.broadcast %cst_17 : f32 to vector<8x128xf32>
      %c0_18 = arith.constant 0 : index
      %c0_19 = arith.constant 0 : index
      %35 = vector.load %arg5[%c0_18, %c0_19] : memref<8x128xf32, #tpu.memory_space<vmem>>, vector<8x128xf32>
      tpu.vector_store %arg5[%c0_18, %c0_19], %34 {strides = array<i32>} : memref<8x128xf32, #tpu.memory_space<vmem>>, vector<8x128xf32>,
    } else {
    }
    %c0 = arith.constant 0 : index
    %c0_1 = arith.constant 0 : index
    %3 = vector.load %arg2[%c0, %c0_1] : memref<16x128xf32, #tpu.memory_space<vmem>>, vector<16x128xf32>
    %c0_2 = arith.constant 0 : index
    %c0_3 = arith.constant 0 : index
    %4 = vector.load %arg3[%c0_2, %c0_3] : memref<16x128xf32, #tpu.memory_space<vmem>>, vector<16x128xf32>
    %5 = arith.subf %3, %4 : vector<16x128xf32>
    %6 = math.absf %5 : vector<16x128xf32>
    %cst = arith.constant 1.000000e+00 : f32
    %7 = vector.broadcast %cst : f32 to vector<16x128xf32>
    %8 = arith.subf %7, %6 : vector<16x128xf32>
    %9 = math.log %8 : vector<16x128xf32>
    %cst_4 = arith.constant -1.000000e+02 : f32
    %10 = vector.broadcast %cst_4 : f32 to vector<16x128xf32>
    %11 = arith.maximumf %9, %10 : vector<16x128xf32>
    %12 = arith.mulf %6, %6 : vector<16x128xf32>
    %cst_5 = arith.constant -5.000000e-01 : f32
    %13 = vector.broadcast %cst_5 : f32 to vector<16x128xf32>
    %14 = arith.mulf %13, %12 : vector<16x128xf32>
    %15 = arith.mulf %14, %11 : vector<16x128xf32>
    %cst_6 = arith.constant 1.000000e+00 : f32
    %16 = vector.broadcast %cst_6 : f32 to vector<16x128xf32>
    %17 = arith.cmpf olt, %6, %16 : vector<16x128xf32>
    %cst_7 = arith.constant 2.500000e-01 : f32
    %18 = vector.broadcast %cst_7 : f32 to vector<16x128xf32>
    %19 = arith.mulf %18, %12 : vector<16x128xf32>
    %cst_8 = arith.constant 5.000000e-01 : f32
    %20 = vector.broadcast %cst_8 : f32 to vector<16x128xf32>
    %21 = arith.mulf %20, %6 : vector<16x128xf32>
    %cst_9 = arith.constant 2.500000e-01 : f32
    %22 = vector.broadcast %cst_9 : f32 to vector<16x128xf32>
    %23 = arith.subf %21, %22 : vector<16x128xf32>
    %24 = arith.select %17, %19, %23 : vector<16x128xi1>, vector<16x128xf32>
    %25 = arith.addf %15, %24 : vector<16x128xf32>
    %c0_10 = arith.constant 0 : index
    %c0_11 = arith.constant 0 : index
    %26 = vector.load %arg5[%c0_10, %c0_11] : memref<8x128xf32, #tpu.memory_space<vmem>>, vector<8x128xf32>
    %27 = vector.shape_cast %25 : vector<16x128xf32> to vector<2x8x128xf32>
    %cst_12 = arith.constant dense<0.000000e+00> : vector<8x128xf32>
    %28 = vector.multi_reduction <add>, %27, %cst_12 [0] : vector<2x8x128xf32> to vector<8x128xf32>
    %29 = arith.addf %26, %28 : vector<8x128xf32>
    %c0_13 = arith.constant 0 : index
    %c0_14 = arith.constant 0 : index
    %30 = vector.load %arg5[%c0_13, %c0_14] : memref<8x128xf32, #tpu.memory_space<vmem>>, vector<8x128xf32>
    tpu.vector_store %arg5[%c0_13, %c0_14], %29 {strides = array<i32>} : memref<8x128xf32, #tpu.memory_space<vmem>>, vector<8x128xf32>,
    %c0_i32_15 = arith.constant 0 : i32
    %31 = arith.cmpi eq, %arg1, %c0_i32_15 : i32
    %32 = arith.extui %31 : i1 to i32
    %c0_i32_16 = arith.constant 0 : i32
    %33 = arith.cmpi ne, %32, %c0_i32_16 : i32
    scf.if %33 {
      %c0_17 = arith.constant 0 : index
      %c0_18 = arith.constant 0 : index
      %34 = vector.load %arg5[%c0_17, %c0_18] : memref<8x128xf32, #tpu.memory_space<vmem>>, vector<8x128xf32>
      %c0_19 = arith.constant 0 : index
      %c0_20 = arith.constant 0 : index
      %c0_21 = arith.constant 0 : index
      %35 = vector.load %arg4[%c0_19, %c0_20, %c0_21] : memref<1x8x128xf32, #tpu.memory_space<vmem>>, vector<1x8x128xf32>
      %36 = vector.shape_cast %35 : vector<1x8x128xf32> to vector<8x128xf32>
      %37 = vector.shape_cast %34 : vector<8x128xf32> to vector<1x8x128xf32>
      tpu.vector_store %arg4[%c0_19, %c0_20, %c0_21], %37 {strides = array<i32>} : memref<1x8x128xf32, #tpu.memory_space<vmem>>, vector<1x8x128xf32>,
    } else {
    }
    return
  }
  func.func @transform_0(%arg0: i32, %arg1: i32) -> (i32, i32) {
    %c1_i32 = arith.constant 1 : i32
    %0 = arith.muli %arg0, %c1_i32 : i32
    %1 = arith.addi %0, %arg1 : i32
    %c0_i32 = arith.constant 0 : i32
    %2 = arith.minsi %1, %c0_i32 : i32
    %c0_i32_0 = arith.constant 0 : i32
    %c0_i32_1 = arith.constant 0 : i32
    return %2, %c0_i32_0 : i32, i32
  }
  func.func @transform_1(%arg0: i32, %arg1: i32) -> (i32, i32) {
    %c1_i32 = arith.constant 1 : i32
    %0 = arith.muli %arg0, %c1_i32 : i32
    %1 = arith.addi %0, %arg1 : i32
    %c0_i32 = arith.constant 0 : i32
    %2 = arith.minsi %1, %c0_i32 : i32
    %c0_i32_0 = arith.constant 0 : i32
    %c0_i32_1 = arith.constant 0 : i32
    return %2, %c0_i32_0 : i32, i32
  }
  func.func @transform_2(%arg0: i32, %arg1: i32) -> (i32, i32, i32) {
    %c0_i32 = arith.constant 0 : i32
    %c0_i32_0 = arith.constant 0 : i32
    %c0_i32_1 = arith.constant 0 : i32
    return %arg0, %c0_i32, %c0_i32_0 : i32, i32, i32
  }
}

</mosaic_0001>

<llo_original>
// kernel: focal_l1_loss.1
$region0: #{focal_l1_loss.1}
  #allocation0 [shape = 'u32[]', space=smem, size = 0x4, offset = 0x4, fixed_abs, tag = 'smem constant byte address 0x4 - core index']
  #allocation1 [shape = 'u32[144,128]{1,0:T(1,128)}', space=vmem, size = 0x12000, scoped, tag = 'internal scratch']
  #allocation2 [shape = 'f32[8,128]{1,0:T(8,128)}', space=vmem, size = 0x1000, scoped, tag = 'scratch operand']
  %s0 = inlined_call_operand.vmem [shape: f32[16,128], index: 0, kind: input, shape index: {}]
  %s1 = inlined_call_operand.vmem [shape: f32[16,128], index: 1, kind: input, shape index: {}]
  %s2 = inlined_call_operand.vmem [shape: f32[1,8,128], index: 2, kind: output, shape index: {}]
  %s3 = sld [smem:[#allocation0]]
  $region26: #{focal_l1_loss.1} parent=0
    _
  %s5 = ssub.s32 1, %s3
  %s6 = scalar_select 0, %s5, %s3
  // Predicated region
  $region2: #{focal_l1_loss.1} parent=0 // pred_check
    _
  $region3: #{focal_l1_loss.1} parent=0 // pred_check_branch
    %8 = sbr.rel (0) target = $region5
  $region4: #{focal_l1_loss.1} parent=0 // pred_region
    %s9 = sadd.s32 0, 0
    %p10 = scmp.lt.s32.totalorder %s9, 0
    %s11 = scalar_select %p10, %s9, 0
    %s12 = smul.u32 2, %s11
    %p13 = scmp.lt.s32.totalorder %s12, 1
    %s14 = scalar_select %p13, %s12, 1
    %s15 = smul.addr %s14, 8
    %s16 = scalar_lea.vmem %s0, %s15
    %s17 = sadd.s32 0, 0
    %p18 = scmp.lt.s32.totalorder %s17, 0
    %s19 = scalar_select %p18, %s17, 0
    %s20 = smul.u32 2, %s19
  $region5: #{focal_l1_loss.1} parent=0 // pred_fallthru
    _
  // Predicated region
  $region6: #{focal_l1_loss.1} parent=0 // pred_check
    _
  $region7: #{focal_l1_loss.1} parent=0 // pred_check_branch
    %22 = sbr.rel (0) target = $region9
  $region8: #{focal_l1_loss.1} parent=0 // pred_region
    %s23 = sadd.s32 0, 0
    %p24 = scmp.lt.s32.totalorder %s23, 0
    %s25 = scalar_select %p24, %s23, 0
    %s26 = smul.u32 2, %s25
    %p27 = scmp.lt.s32.totalorder %s26, 1
    %s28 = scalar_select %p27, %s26, 1
    %s29 = smul.addr %s28, 8
    %s30 = scalar_lea.vmem %s1, %s29
    %s31 = sadd.s32 0, 0
    %p32 = scmp.lt.s32.totalorder %s31, 0
    %s33 = scalar_select %p32, %s31, 0
    %s34 = smul.u32 2, %s33
  $region9: #{focal_l1_loss.1} parent=0 // pred_fallthru
    _
  %s35 = sadd.s32 0, 0
  %p36 = scmp.lt.s32.totalorder %s35, 0
  %s37 = scalar_select %p36, %s35, 0
  %s38 = smul.u32 2, %s37
  %p39 = scmp.lt.s32.totalorder %s38, 1
  %s40 = scalar_select %p39, %s38, 1
  %s41 = smul.addr %s40, 8
  %s42 = scalar_lea.vmem %s0, %s41
  %s43 = sadd.s32 0, 0
  %p44 = scmp.lt.s32.totalorder %s43, 0
  %s45 = scalar_select %p44, %s43, 0
  %s46 = smul.u32 2, %s45
  %p47 = scmp.lt.s32.totalorder %s46, 1
  %s48 = scalar_select %p47, %s46, 1
  %s49 = smul.addr %s48, 8
  %s50 = scalar_lea.vmem %s1, %s49
  %s51 = sadd.s32 0, 0
  %p52 = scmp.lt.s32.totalorder %s51, 0
  %s53 = scalar_select %p52, %s51, 0
  %s54 = smul.u32 2, %s53
  %p55 = scmp.lt.s32.totalorder %s54, 1
  %s56 = scalar_select %p55, %s54, 1
  %s57 = smul.addr %s56, 8
  %s58 = scalar_lea.vmem %s0, %s57
  %s59 = sadd.s32 0, 0
  %p60 = scmp.lt.s32.totalorder %s59, 0
  %s61 = scalar_select %p60, %s59, 0
  %s62 = smul.u32 2, %s61
  %s63 = sadd.s32 0, 0
  %p64 = scmp.lt.s32.totalorder %s63, 0
  %s65 = scalar_select %p64, %s63, 0
  %s66 = smul.u32 2, %s65
  %p67 = scmp.lt.s32.totalorder %s66, 1
  %s68 = scalar_select %p67, %s66, 1
  %s69 = smul.addr %s68, 8
  %s70 = scalar_lea.vmem %s1, %s69
  %s71 = sadd.s32 0, 0
  %p72 = scmp.lt.s32.totalorder %s71, 0
  %s73 = scalar_select %p72, %s71, 0
  %s74 = smul.u32 2, %s73
  %p75 = scmp.eq.s32.totalorder 0, 0
  // Predicated region
  $region10: #{focal_l1_loss.1} parent=0 // pred_check
    %p76 = pneg %p75
  $region11: #{focal_l1_loss.1} parent=0 // pred_check_branch
    %78 = sbr.rel (%p76) target = $region13
  $region12: #{focal_l1_loss.1} parent=0 // pred_region
    %79 = vst [vmem:[#allocation2] sm:$0xff] 0.0
  $region13: #{focal_l1_loss.1} parent=0 // pred_fallthru
    _
  %v80 = vld [vmem:[%s58] sm:$0xff]
  %v81 = vld [vmem:[%s58 + $0x8] sm:$0xff]
  %v82 = vld [vmem:[%s70] sm:$0xff]
  %v83 = vld [vmem:[%s70 + $0x8] sm:$0xff]
  %v84 = vsub.f32 %v80, %v82
  %v85 = vsub.f32 %v81, %v83
  %v86 = vand.u32 2147483647, %v84
  %v87 = vand.u32 2147483647, %v85
  %v88 = vsub.f32 1.0, %v86
  %v89 = vsub.f32 1.0, %v87
  %v90 = vlog2.pop %v88
  %v91 = vmul.f32 %v90, 0.6931472
  %v92 = vlog2.pop %v89
  %v93 = vmul.f32 %v92, 0.6931472
  %v94 = vmax.f32 %v91, -100.0
  %v95 = vmax.f32 %v93, -100.0
  %v96 = vmul.f32 %v86, %v86
  %v97 = vmul.f32 %v87, %v87
  %v98 = vmul.f32 %v96, -0.5
  %v99 = vmul.f32 %v97, -0.5
  %v100 = vmul.f32 %v98, %v94
  %v101 = vmul.f32 %v99, %v95
  %vm102 = vcmp.lt.f32.partialorder %v86, 1.0
  %vm103 = vcmp.lt.f32.partialorder %v87, 1.0
  %v104 = vmul.f32 %v96, 0.25
  %v105 = vmul.f32 %v97, 0.25
  %v106 = vmul.f32 %v86, 0.5
  %v107 = vmul.f32 %v87, 0.5
  %v108 = vsub.f32 %v106, 0.25
  %v109 = vsub.f32 %v107, 0.25
  %v110 = vsel %vm102, %v104, %v108
  %v111 = vsel %vm103, %v105, %v109
  %v112 = vadd.f32 %v100, %v110
  %v113 = vadd.f32 %v101, %v111
  %v114 = vld [vmem:[#allocation2] sm:$0xff]
  %v115 = vadd.f32 %v112, %v113
  %v116 = vadd.f32 %v114, %v115
  %117 = vst [vmem:[#allocation2] sm:$0xff] %v116
  // Predicated region
  $region14: #{focal_l1_loss.1} parent=0 // pred_check
    %p118 = pneg %p75
  $region15: #{focal_l1_loss.1} parent=0 // pred_check_branch
    %120 = sbr.rel (%p118) target = $region17
  $region16: #{focal_l1_loss.1} parent=0 // pred_region
    %v121 = vld [vmem:[#allocation2] sm:$0xff]
    %122 = vst [vmem:[%s2] sm:$0xff] %v121
  $region17: #{focal_l1_loss.1} parent=0 // pred_fallthru
    _
  // Predicated region
  $region18: #{focal_l1_loss.1} parent=0 // pred_check
    _
  $region19: #{focal_l1_loss.1} parent=0 // pred_check_branch
    %124 = sbr.rel (0) target = $region21
  $region20: #{focal_l1_loss.1} parent=0 // pred_region
    _
  $region21: #{focal_l1_loss.1} parent=0 // pred_fallthru
    _
  // Predicated region
  $region22: #{focal_l1_loss.1} parent=0 // pred_check
    _
  $region23: #{focal_l1_loss.1} parent=0 // pred_check_branch
    %126 = sbr.rel (0) target = $region25
  $region24: #{focal_l1_loss.1} parent=0 // pred_region
    _
  $region25: #{focal_l1_loss.1} parent=0 // pred_fallthru
    _

</llo_original>
